<compile_context>
chip_gen: v5e
topology: v5e:2x2
jax: 0.10.0
libtpu: 0.0.40
codegen_flags: <defaults>
</compile_context>

<pallas_src>
import functools
import math

import jax
import jax.numpy as jnp
from jax.experimental import pallas as pl
from jax.experimental.pallas import tpu as pltpu


def _round_up(x, m):
    return ((x + m - 1) // m) * m


# ---------------------------------------------------------------------------
# Kernel body
# ---------------------------------------------------------------------------
def _nbeats_kernel(num_body, x_ref, wb_ref, bb_ref, wh_ref, bh_ref, out_ref):
    """One batch tile through the whole block.

    x_ref  : [bt, d_pad]        compute dtype (bf16 by default)
    wb_ref : [L, d_pad, d_pad]  stacked body weights, compute dtype
    bb_ref : [L, 1, d_pad]      stacked body biases, f32
    wh_ref : [d_pad, t_pad]     fused theta-head weight, compute dtype
    bh_ref : [1, t_pad]         fused theta-head bias, f32
    out_ref: [bt, t_pad]        fused theta-head outputs, f32
    """
    compute_dtype = wb_ref.dtype
    h = x_ref[...]
    for l in range(num_body):                       # static, unrolled
        acc = jnp.dot(h, wb_ref[l], preferred_element_type=jnp.float32)
        h = jnp.maximum(acc + bb_ref[l], 0.0).astype(compute_dtype)
    acc = jnp.dot(h, wh_ref[...], preferred_element_type=jnp.float32)
    out_ref[...] = jnp.maximum(acc + bh_ref[...], 0.0).astype(out_ref.dtype)


# ---------------------------------------------------------------------------
# One-time parameter preparation (hoisted out of the per-call hot path)
# ---------------------------------------------------------------------------
def prepare_nbeats_block(body_params, head_params, *,
                         compute_dtype=jnp.bfloat16):
    """Pad, fuse and cast NBeatsBlock parameters ONCE; reuse every forward.

    body_params: list of (W [in, out], b [out] or [1, out]) for input+hidden.
    head_params: list of (W [in, theta_dim_i], b) for the theta heads.
    compute_dtype: dtype fed to the MXU (bf16 default; f32 for exact parity).
    """
    layer_dim = int(body_params[0][0].shape[0])
    thetas_dim = tuple(int(w.shape[1]) for w, _ in head_params)
    sum_theta = sum(thetas_dim)
    d_pad = _round_up(layer_dim, 128)              # body K/N: 128-lane aligned
    t_pad = _round_up(max(sum_theta, 1), 128)      # fused head out: lane-dense
    num_body = len(body_params)
    f32 = jnp.float32

    wb = jnp.zeros((num_body, d_pad, d_pad), f32)
    bb = jnp.zeros((num_body, 1, d_pad), f32)
    for l, (w, b) in enumerate(body_params):
        wb = wb.at[l, :layer_dim, :layer_dim].set(w.astype(f32))
        bb = bb.at[l, :, :layer_dim].set(b.astype(f32).reshape(1, layer_dim))

    wh = jnp.concatenate([w.astype(f32) for w, _ in head_params], axis=1)
    bh = jnp.concatenate([b.astype(f32).reshape(1, -1) for _, b in head_params],
                         axis=1)
    wh_p = jnp.zeros((d_pad, t_pad), f32).at[:layer_dim, :sum_theta].set(wh)
    bh_p = jnp.zeros((1, t_pad), f32).at[:, :sum_theta].set(bh)

    return dict(
        wb=wb.astype(compute_dtype),     # MXU inputs (bf16 default)
        bb=bb,                           # biases stay f32 (f32 epilogue)
        wh=wh_p.astype(compute_dtype),
        bh=bh_p,
        layer_dim=layer_dim,
        thetas_dim=thetas_dim,
        d_pad=d_pad,
        t_pad=t_pad,
        compute_dtype=compute_dtype,
    )


# ---------------------------------------------------------------------------
# Batch-tile selection
# ---------------------------------------------------------------------------
def _choose_batch_tile(batch, batch_tile):
    batch8 = _round_up(batch, 8)
    bt = max(8, min(_round_up(batch_tile, 8), batch8))
    n_tiles = -(-batch8 // bt)
    # keep >= 2 grid steps when batch permits so the "parallel" batch axis can
    # actually split across v7x's two TensorCores
    if n_tiles == 1 and batch8 >= 16:
        n_tiles = 2
    # rebalance the tile so ragged batches don't run a near-full garbage tile
    bt = _round_up(-(-batch8 // n_tiles), 8)
    return bt, n_tiles * bt


# ---------------------------------------------------------------------------
# Forward
# ---------------------------------------------------------------------------
def nbeats_block_forward(x, prepared, *, batch_tile=512):
    """NBeatsBlock forward as one fused Pallas kernel.

    x: [batch, layer_dim] input.  Returns list of [batch, theta_dim_i] outputs.
    batch_tile ~512 fills the MXU M dimension on v5e/v6e (128 MiB VMEM); the
    exact VMEM budget below also keeps v7x (64 MiB / TC) comfortable.
    """
    batch, layer_dim = x.shape
    assert layer_dim == prepared["layer_dim"]
    d_pad, t_pad = prepared["d_pad"], prepared["t_pad"]
    thetas_dim = prepared["thetas_dim"]
    compute_dtype = prepared["compute_dtype"]
    wb, bb = prepared["wb"], prepared["bb"]
    wh, bh = prepared["wh"], prepared["bh"]
    num_body = wb.shape[0]

    bt, batch_pad = _choose_batch_tile(batch, batch_tile)
    grid = (batch_pad // bt,)

    # pad/cast the input only when needed (skip the copy if already aligned)
    if batch_pad == batch and d_pad == layer_dim:
        x_in = x.astype(compute_dtype)
    else:
        x_in = jnp.zeros((batch_pad, d_pad), compute_dtype)
        x_in = x_in.at[:batch, :layer_dim].set(x.astype(compute_dtype))

    out_dtype = jnp.float32
    w_item = jnp.dtype(compute_dtype).itemsize

    # exact VMEM accounting (weights single-buffered, activations double)
    weight_bytes = w_item * (num_body * d_pad * d_pad + d_pad * t_pad)
    bias_bytes = 4 * (num_body * d_pad + t_pad)
    act_bytes = 2 * (bt * d_pad * w_item + bt * t_pad * 4)

    flops = 2 * batch_pad * (num_body * d_pad * d_pad + d_pad * t_pad)
    bytes_accessed = (batch_pad * d_pad * w_item + batch_pad * t_pad * 4
                      + weight_bytes + bias_bytes)
    cost = pl.CostEstimate(flops=flops, transcendentals=0,
                           bytes_accessed=bytes_accessed)

    kernel = functools.partial(_nbeats_kernel, num_body)

    def build(weight_mode, weight_buffers):
        wkw = {} if weight_mode is None else {"pipeline_mode": weight_mode}
        in_specs = [
            pl.BlockSpec((bt, d_pad), lambda i: (i, 0)),
            pl.BlockSpec((num_body, d_pad, d_pad), lambda i: (0, 0, 0), **wkw),
            pl.BlockSpec((num_body, 1, d_pad), lambda i: (0, 0, 0), **wkw),
            pl.BlockSpec((d_pad, t_pad), lambda i: (0, 0), **wkw),
            pl.BlockSpec((1, t_pad), lambda i: (0, 0), **wkw),
        ]
        out_specs = pl.BlockSpec((bt, t_pad), lambda i: (i, 0))
        vmem_need = (weight_buffers * (weight_bytes + bias_bytes)
                     + act_bytes + (2 << 20))           # + internal scratch
        vmem_limit = int(min(48 << 20, max(8 << 20, int(1.25 * vmem_need))))
        return pl.pallas_call(
            kernel,
            out_shape=jax.ShapeDtypeStruct((batch_pad, t_pad), out_dtype),
            grid_spec=pltpu.PrefetchScalarGridSpec(
                num_scalar_prefetch=0,
                grid=grid,
                in_specs=in_specs,
                out_specs=out_specs,
            ),
            compiler_params=pltpu.CompilerParams(
                dimension_semantics=("parallel",),      # shard batch over TCs
                vmem_limit_bytes=vmem_limit,
            ),
            cost_estimate=cost,
        )

    try:
        # constant-index weight blocks never change: single-buffer them
        out_pad = build(pl.Buffered(1), 1)(x_in, wb, bb, wh, bh)
    except Exception:
        # fallback if this jax version rejects Buffered(1) on pallas_call specs
        out_pad = build(None, 2)(x_in, wb, bb, wh, bh)

    # slice the fused, padded output slab back into per-head outputs
    outs, off = [], 0
    for td in thetas_dim:
        outs.append(out_pad[:batch, off:off + td])
        off += td
    return outs


# ---------------------------------------------------------------------------
# Initialization & pure-JAX reference
# ---------------------------------------------------------------------------
def xavier_uniform(key, fan_in, fan_out, dtype=jnp.float32):
    bound = math.sqrt(6.0 / (fan_in + fan_out))
    return jax.random.uniform(key, (fan_in, fan_out), dtype=dtype,
                              minval=-bound, maxval=bound)


def init_nbeats_params(key, layer_dim, thetas_dim, num_hidden_layers):
    """Matches NBeatsBlock.__init__: xavier-uniform weights, zero biases.
    Weights stored [in, out] (transposed from PyTorch nn.Linear)."""
    body_params = []
    num_body = 1 + num_hidden_layers          # input layer + hidden layers
    keys = jax.random.split(key, num_body + len(thetas_dim))
    for i in range(num_body):
        w = xavier_uniform(keys[i], layer_dim, layer_dim)
        b = jnp.zeros((1, layer_dim), jnp.float32)
        body_params.append((w, b))
    head_params = []
    for i, td in enumerate(thetas_dim):
        w = xavier_uniform(keys[num_body + i], layer_dim, td)
        b = jnp.zeros((1, td), jnp.float32)
        head_params.append((w, b))
    return body_params, head_params


def nbeats_block_reference(x, body_params, head_params):
    h = x
    for w, b in body_params:
        h = jnp.maximum(h @ w + b, 0.0)
    return [jnp.maximum(h @ w + b, 0.0) for w, b in head_params]


if __name__ == "__main__":
    # Small shapes consistent with the module:
    #   layer_dim=32, thetas_dim=[16, 8], num_hidden_layers=2, batch=8
    batch = 8
    layer_dim = 32
    thetas_dim = [16, 8]
    num_hidden_layers = 2

    key = jax.random.PRNGKey(0)
    k_x, k_p = jax.random.split(key)
    x = jax.random.normal(k_x, (batch, layer_dim), jnp.float32)
    body_params, head_params = init_nbeats_params(
        k_p, layer_dim, thetas_dim, num_hidden_layers)
    refs = nbeats_block_reference(x, body_params, head_params)

    # f32 MXU-input path: exact parity check against the pure-JAX reference
    prep_f32 = prepare_nbeats_block(body_params, head_params,
                                    compute_dtype=jnp.float32)
    outs_f32 = nbeats_block_forward(x, prep_f32, batch_tile=512)
    outs_f32 = [jax.block_until_ready(o) for o in outs_f32]
    for o, r, td in zip(outs_f32, refs, thetas_dim):
        assert o.shape == (batch, td), (o.shape, (batch, td))
        assert jnp.allclose(o, r, atol=1e-5, rtol=1e-5), "f32 path mismatch"

    # default fast path: bf16 MXU inputs, f32 accumulate (looser tolerance —
    # precision, not a bug)
    prep_bf16 = prepare_nbeats_block(body_params, head_params)
    outs = nbeats_block_forward(x, prep_bf16, batch_tile=512)
    outs = [jax.block_until_ready(o) for o in outs]
    for o, r, td in zip(outs, refs, thetas_dim):
        assert o.shape == (batch, td), (o.shape, (batch, td))
        assert jnp.allclose(o, r, atol=1e-1, rtol=1e-1), "bf16 path mismatch"

    # TODO(synk): for a full N-BEATS stack, add a grid axis (or cross-call
    # prefetch) over blocks so body weights stay resident across blocks.

    print("KERNEL_OK")
</pallas_src>

<mosaic_0001>
module attributes {stable_mosaic.version = 11 : i64} {
  func.func @_nbeats_kernel(%arg0: i32, %arg1: memref<8x128xf32, #tpu.memory_space<vmem>>, %arg2: memref<3x128x128xf32, #tpu.memory_space<vmem>>, %arg3: memref<3x1x128xf32, #tpu.memory_space<vmem>>, %arg4: memref<128x128xf32, #tpu.memory_space<vmem>>, %arg5: memref<1x128xf32, #tpu.memory_space<vmem>>, %arg6: memref<8x128xf32, #tpu.memory_space<vmem>>) attributes {dimension_semantics = [#tpu.dimension_semantics<parallel>], iteration_bounds = array<i64: 1>, scalar_prefetch = 0 : i64, scratch_operands = 0 : i64, tpu.core_type = #tpu.core_type<tc>, window_params = [{transform_indices = @transform_0, window_bounds = array<i64: 8, 128>}, {pipeline_mode = #tpu.pipeline_mode<synchronous>, transform_indices = @transform_1, window_bounds = array<i64: 3, 128, 128>}, {pipeline_mode = #tpu.pipeline_mode<synchronous>, transform_indices = @transform_2, window_bounds = array<i64: 3, 1, 128>}, {pipeline_mode = #tpu.pipeline_mode<synchronous>, transform_indices = @transform_3, window_bounds = array<i64: 128, 128>}, {pipeline_mode = #tpu.pipeline_mode<synchronous>, transform_indices = @transform_4, window_bounds = array<i64: 1, 128>}, {transform_indices = @transform_5, window_bounds = array<i64: 8, 128>}]} {
    %c0 = arith.constant 0 : index
    %c0_0 = arith.constant 0 : index
    %0 = vector.load %arg1[%c0, %c0_0] : memref<8x128xf32, #tpu.memory_space<vmem>>, vector<8x128xf32>
    %c0_1 = arith.constant 0 : index
    %c0_2 = arith.constant 0 : index
    %c0_3 = arith.constant 0 : index
    %1 = vector.load %arg2[%c0_1, %c0_2, %c0_3] : memref<3x128x128xf32, #tpu.memory_space<vmem>>, vector<1x128x128xf32>
    %2 = vector.shape_cast %1 : vector<1x128x128xf32> to vector<128x128xf32>
    %cst = arith.constant dense<0.000000e+00> : vector<8x128xf32>
    %3 = tpu.matmul %0, %2, %cst {dimension_numbers = #tpu.dot_dimension_numbers<[1], [0], [0], [1], [0, 0, 1, 1], [], []>} : vector<8x128xf32>, vector<128x128xf32>, vector<8x128xf32> -> vector<8x128xf32>
    %c0_4 = arith.constant 0 : index
    %c0_5 = arith.constant 0 : index
    %c0_6 = arith.constant 0 : index
    %4 = vector.load %arg3[%c0_4, %c0_5, %c0_6] : memref<3x1x128xf32, #tpu.memory_space<vmem>>, vector<1x1x128xf32>
    %5 = vector.shape_cast %4 : vector<1x1x128xf32> to vector<1x128xf32>
    %6 = vector.broadcast %5 : vector<1x128xf32> to vector<8x128xf32>
    %7 = arith.addf %3, %6 : vector<8x128xf32>
    %cst_7 = arith.constant 0.000000e+00 : f32
    %8 = vector.broadcast %cst_7 : f32 to vector<8x128xf32>
    %9 = arith.maximumf %7, %8 : vector<8x128xf32>
    %c1 = arith.constant 1 : index
    %c0_8 = arith.constant 0 : index
    %c0_9 = arith.constant 0 : index
    %10 = vector.load %arg2[%c1, %c0_8, %c0_9] : memref<3x128x128xf32, #tpu.memory_space<vmem>>, vector<1x128x128xf32>
    %11 = vector.shape_cast %10 : vector<1x128x128xf32> to vector<128x128xf32>
    %cst_10 = arith.constant dense<0.000000e+00> : vector<8x128xf32>
    %12 = tpu.matmul %9, %11, %cst_10 {dimension_numbers = #tpu.dot_dimension_numbers<[1], [0], [0], [1], [0, 0, 1, 1], [], []>} : vector<8x128xf32>, vector<128x128xf32>, vector<8x128xf32> -> vector<8x128xf32>
    %c1_11 = arith.constant 1 : index
    %c0_12 = arith.constant 0 : index
    %c0_13 = arith.constant 0 : index
    %13 = vector.load %arg3[%c1_11, %c0_12, %c0_13] : memref<3x1x128xf32, #tpu.memory_space<vmem>>, vector<1x1x128xf32>
    %14 = vector.shape_cast %13 : vector<1x1x128xf32> to vector<1x128xf32>
    %15 = vector.broadcast %14 : vector<1x128xf32> to vector<8x128xf32>
    %16 = arith.addf %12, %15 : vector<8x128xf32>
    %cst_14 = arith.constant 0.000000e+00 : f32
    %17 = vector.broadcast %cst_14 : f32 to vector<8x128xf32>
    %18 = arith.maximumf %16, %17 : vector<8x128xf32>
    %c2 = arith.constant 2 : index
    %c0_15 = arith.constant 0 : index
    %c0_16 = arith.constant 0 : index
    %19 = vector.load %arg2[%c2, %c0_15, %c0_16] : memref<3x128x128xf32, #tpu.memory_space<vmem>>, vector<1x128x128xf32>
    %20 = vector.shape_cast %19 : vector<1x128x128xf32> to vector<128x128xf32>
    %cst_17 = arith.constant dense<0.000000e+00> : vector<8x128xf32>
    %21 = tpu.matmul %18, %20, %cst_17 {dimension_numbers = #tpu.dot_dimension_numbers<[1], [0], [0], [1], [0, 0, 1, 1], [], []>} : vector<8x128xf32>, vector<128x128xf32>, vector<8x128xf32> -> vector<8x128xf32>
    %c2_18 = arith.constant 2 : index
    %c0_19 = arith.constant 0 : index
    %c0_20 = arith.constant 0 : index
    %22 = vector.load %arg3[%c2_18, %c0_19, %c0_20] : memref<3x1x128xf32, #tpu.memory_space<vmem>>, vector<1x1x128xf32>
    %23 = vector.shape_cast %22 : vector<1x1x128xf32> to vector<1x128xf32>
    %24 = vector.broadcast %23 : vector<1x128xf32> to vector<8x128xf32>
    %25 = arith.addf %21, %24 : vector<8x128xf32>
    %cst_21 = arith.constant 0.000000e+00 : f32
    %26 = vector.broadcast %cst_21 : f32 to vector<8x128xf32>
    %27 = arith.maximumf %25, %26 : vector<8x128xf32>
    %c0_22 = arith.constant 0 : index
    %c0_23 = arith.constant 0 : index
    %28 = vector.load %arg4[%c0_22, %c0_23] : memref<128x128xf32, #tpu.memory_space<vmem>>, vector<128x128xf32>
    %cst_24 = arith.constant dense<0.000000e+00> : vector<8x128xf32>
    %29 = tpu.matmul %27, %28, %cst_24 {dimension_numbers = #tpu.dot_dimension_numbers<[1], [0], [0], [1], [0, 0, 1, 1], [], []>} : vector<8x128xf32>, vector<128x128xf32>, vector<8x128xf32> -> vector<8x128xf32>
    %c0_25 = arith.constant 0 : index
    %c0_26 = arith.constant 0 : index
    %30 = vector.load %arg5[%c0_25, %c0_26] : memref<1x128xf32, #tpu.memory_space<vmem>>, vector<1x128xf32>
    %31 = vector.broadcast %30 : vector<1x128xf32> to vector<8x128xf32>
    %32 = arith.addf %29, %31 : vector<8x128xf32>
    %cst_27 = arith.constant 0.000000e+00 : f32
    %33 = vector.broadcast %cst_27 : f32 to vector<8x128xf32>
    %34 = arith.maximumf %32, %33 : vector<8x128xf32>
    %c0_28 = arith.constant 0 : index
    %c0_29 = arith.constant 0 : index
    %35 = vector.load %arg6[%c0_28, %c0_29] : memref<8x128xf32, #tpu.memory_space<vmem>>, vector<8x128xf32>
    tpu.vector_store %arg6[%c0_28, %c0_29], %34 {strides = array<i32>} : memref<8x128xf32, #tpu.memory_space<vmem>>, vector<8x128xf32>,
    return
  }
  func.func @transform_0(%arg0: i32) -> (i32, i32) {
    %c0_i32 = arith.constant 0 : i32
    %c0_i32_0 = arith.constant 0 : i32
    return %arg0, %c0_i32 : i32, i32
  }
  func.func @transform_1(%arg0: i32) -> (i32, i32, i32) {
    %c0_i32 = arith.constant 0 : i32
    %c0_i32_0 = arith.constant 0 : i32
    %c0_i32_1 = arith.constant 0 : i32
    %c0_i32_2 = arith.constant 0 : i32
    return %c0_i32, %c0_i32_0, %c0_i32_1 : i32, i32, i32
  }
  func.func @transform_2(%arg0: i32) -> (i32, i32, i32) {
    %c0_i32 = arith.constant 0 : i32
    %c0_i32_0 = arith.constant 0 : i32
    %c0_i32_1 = arith.constant 0 : i32
    %c0_i32_2 = arith.constant 0 : i32
    return %c0_i32, %c0_i32_0, %c0_i32_1 : i32, i32, i32
  }
  func.func @transform_3(%arg0: i32) -> (i32, i32) {
    %c0_i32 = arith.constant 0 : i32
    %c0_i32_0 = arith.constant 0 : i32
    %c0_i32_1 = arith.constant 0 : i32
    return %c0_i32, %c0_i32_0 : i32, i32
  }
  func.func @transform_4(%arg0: i32) -> (i32, i32) {
    %c0_i32 = arith.constant 0 : i32
    %c0_i32_0 = arith.constant 0 : i32
    %c0_i32_1 = arith.constant 0 : i32
    return %c0_i32, %c0_i32_0 : i32, i32
  }
  func.func @transform_5(%arg0: i32) -> (i32, i32) {
    %c0_i32 = arith.constant 0 : i32
    %c0_i32_0 = arith.constant 0 : i32
    return %arg0, %c0_i32 : i32, i32
  }
}

module attributes {stable_mosaic.version = 11 : i64} {
  func.func @_nbeats_kernel(%arg0: i32, %arg1: memref<8x128xf32, #tpu.memory_space<vmem>>, %arg2: memref<3x128x128xf32, #tpu.memory_space<vmem>>, %arg3: memref<3x1x128xf32, #tpu.memory_space<vmem>>, %arg4: memref<128x128xf32, #tpu.memory_space<vmem>>, %arg5: memref<1x128xf32, #tpu.memory_space<vmem>>, %arg6: memref<8x128xf32, #tpu.memory_space<vmem>>) attributes {dimension_semantics = [#tpu.dimension_semantics<parallel>], iteration_bounds = array<i64: 1>, scalar_prefetch = 0 : i64, scratch_operands = 0 : i64, tpu.core_type = #tpu.core_type<tc>, window_params = [{transform_indices = @transform_0, window_bounds = array<i64: 8, 128>}, {pipeline_mode = #tpu.pipeline_mode<synchronous>, transform_indices = @transform_1, window_bounds = array<i64: 3, 128, 128>}, {pipeline_mode = #tpu.pipeline_mode<synchronous>, transform_indices = @transform_2, window_bounds = array<i64: 3, 1, 128>}, {pipeline_mode = #tpu.pipeline_mode<synchronous>, transform_indices = @transform_3, window_bounds = array<i64: 128, 128>}, {pipeline_mode = #tpu.pipeline_mode<synchronous>, transform_indices = @transform_4, window_bounds = array<i64: 1, 128>}, {transform_indices = @transform_5, window_bounds = array<i64: 8, 128>}]} {
    %c0 = arith.constant 0 : index
    %c0_0 = arith.constant 0 : index
    %0 = vector.load %arg1[%c0, %c0_0] : memref<8x128xf32, #tpu.memory_space<vmem>>, vector<8x128xf32>
    %c0_1 = arith.constant 0 : index
    %c0_2 = arith.constant 0 : index
    %c0_3 = arith.constant 0 : index
    %1 = vector.load %arg2[%c0_1, %c0_2, %c0_3] : memref<3x128x128xf32, #tpu.memory_space<vmem>>, vector<1x128x128xf32>
    %2 = vector.shape_cast %1 : vector<1x128x128xf32> to vector<128x128xf32>
    %cst = arith.constant dense<0.000000e+00> : vector<8x128xf32>
    %3 = tpu.matmul %0, %2, %cst {dimension_numbers = #tpu.dot_dimension_numbers<[1], [0], [0], [1], [0, 0, 1, 1], [], []>} : vector<8x128xf32>, vector<128x128xf32>, vector<8x128xf32> -> vector<8x128xf32>
    %c0_4 = arith.constant 0 : index
    %c0_5 = arith.constant 0 : index
    %c0_6 = arith.constant 0 : index
    %4 = vector.load %arg3[%c0_4, %c0_5, %c0_6] : memref<3x1x128xf32, #tpu.memory_space<vmem>>, vector<1x1x128xf32>
    %5 = vector.shape_cast %4 : vector<1x1x128xf32> to vector<1x128xf32>
    %6 = vector.broadcast %5 : vector<1x128xf32> to vector<8x128xf32>
    %7 = arith.addf %3, %6 : vector<8x128xf32>
    %cst_7 = arith.constant 0.000000e+00 : f32
    %8 = vector.broadcast %cst_7 : f32 to vector<8x128xf32>
    %9 = arith.maximumf %7, %8 : vector<8x128xf32>
    %c1 = arith.constant 1 : index
    %c0_8 = arith.constant 0 : index
    %c0_9 = arith.constant 0 : index
    %10 = vector.load %arg2[%c1, %c0_8, %c0_9] : memref<3x128x128xf32, #tpu.memory_space<vmem>>, vector<1x128x128xf32>
    %11 = vector.shape_cast %10 : vector<1x128x128xf32> to vector<128x128xf32>
    %cst_10 = arith.constant dense<0.000000e+00> : vector<8x128xf32>
    %12 = tpu.matmul %9, %11, %cst_10 {dimension_numbers = #tpu.dot_dimension_numbers<[1], [0], [0], [1], [0, 0, 1, 1], [], []>} : vector<8x128xf32>, vector<128x128xf32>, vector<8x128xf32> -> vector<8x128xf32>
    %c1_11 = arith.constant 1 : index
    %c0_12 = arith.constant 0 : index
    %c0_13 = arith.constant 0 : index
    %13 = vector.load %arg3[%c1_11, %c0_12, %c0_13] : memref<3x1x128xf32, #tpu.memory_space<vmem>>, vector<1x1x128xf32>
    %14 = vector.shape_cast %13 : vector<1x1x128xf32> to vector<1x128xf32>
    %15 = vector.broadcast %14 : vector<1x128xf32> to vector<8x128xf32>
    %16 = arith.addf %12, %15 : vector<8x128xf32>
    %cst_14 = arith.constant 0.000000e+00 : f32
    %17 = vector.broadcast %cst_14 : f32 to vector<8x128xf32>
    %18 = arith.maximumf %16, %17 : vector<8x128xf32>
    %c2 = arith.constant 2 : index
    %c0_15 = arith.constant 0 : index
    %c0_16 = arith.constant 0 : index
    %19 = vector.load %arg2[%c2, %c0_15, %c0_16] : memref<3x128x128xf32, #tpu.memory_space<vmem>>, vector<1x128x128xf32>
    %20 = vector.shape_cast %19 : vector<1x128x128xf32> to vector<128x128xf32>
    %cst_17 = arith.constant dense<0.000000e+00> : vector<8x128xf32>
    %21 = tpu.matmul %18, %20, %cst_17 {dimension_numbers = #tpu.dot_dimension_numbers<[1], [0], [0], [1], [0, 0, 1, 1], [], []>} : vector<8x128xf32>, vector<128x128xf32>, vector<8x128xf32> -> vector<8x128xf32>
    %c2_18 = arith.constant 2 : index
    %c0_19 = arith.constant 0 : index
    %c0_20 = arith.constant 0 : index
    %22 = vector.load %arg3[%c2_18, %c0_19, %c0_20] : memref<3x1x128xf32, #tpu.memory_space<vmem>>, vector<1x1x128xf32>
    %23 = vector.shape_cast %22 : vector<1x1x128xf32> to vector<1x128xf32>
    %24 = vector.broadcast %23 : vector<1x128xf32> to vector<8x128xf32>
    %25 = arith.addf %21, %24 : vector<8x128xf32>
    %cst_21 = arith.constant 0.000000e+00 : f32
    %26 = vector.broadcast %cst_21 : f32 to vector<8x128xf32>
    %27 = arith.maximumf %25, %26 : vector<8x128xf32>
    %c0_22 = arith.constant 0 : index
    %c0_23 = arith.constant 0 : index
    %28 = vector.load %arg4[%c0_22, %c0_23] : memref<128x128xf32, #tpu.memory_space<vmem>>, vector<128x128xf32>
    %cst_24 = arith.constant dense<0.000000e+00> : vector<8x128xf32>
    %29 = tpu.matmul %27, %28, %cst_24 {dimension_numbers = #tpu.dot_dimension_numbers<[1], [0], [0], [1], [0, 0, 1, 1], [], []>} : vector<8x128xf32>, vector<128x128xf32>, vector<8x128xf32> -> vector<8x128xf32>
    %c0_25 = arith.constant 0 : index
    %c0_26 = arith.constant 0 : index
    %30 = vector.load %arg5[%c0_25, %c0_26] : memref<1x128xf32, #tpu.memory_space<vmem>>, vector<1x128xf32>
    %31 = vector.broadcast %30 : vector<1x128xf32> to vector<8x128xf32>
    %32 = arith.addf %29, %31 : vector<8x128xf32>
    %cst_27 = arith.constant 0.000000e+00 : f32
    %33 = vector.broadcast %cst_27 : f32 to vector<8x128xf32>
    %34 = arith.maximumf %32, %33 : vector<8x128xf32>
    %c0_28 = arith.constant 0 : index
    %c0_29 = arith.constant 0 : index
    %35 = vector.load %arg6[%c0_28, %c0_29] : memref<8x128xf32, #tpu.memory_space<vmem>>, vector<8x128xf32>
    tpu.vector_store %arg6[%c0_28, %c0_29], %34 {strides = array<i32>} : memref<8x128xf32, #tpu.memory_space<vmem>>, vector<8x128xf32>,
    return
  }
  func.func @transform_0(%arg0: i32) -> (i32, i32) {
    %c0_i32 = arith.constant 0 : i32
    %c0_i32_0 = arith.constant 0 : i32
    return %arg0, %c0_i32 : i32, i32
  }
  func.func @transform_1(%arg0: i32) -> (i32, i32, i32) {
    %c0_i32 = arith.constant 0 : i32
    %c0_i32_0 = arith.constant 0 : i32
    %c0_i32_1 = arith.constant 0 : i32
    %c0_i32_2 = arith.constant 0 : i32
    return %c0_i32, %c0_i32_0, %c0_i32_1 : i32, i32, i32
  }
  func.func @transform_2(%arg0: i32) -> (i32, i32, i32) {
    %c0_i32 = arith.constant 0 : i32
    %c0_i32_0 = arith.constant 0 : i32
    %c0_i32_1 = arith.constant 0 : i32
    %c0_i32_2 = arith.constant 0 : i32
    return %c0_i32, %c0_i32_0, %c0_i32_1 : i32, i32, i32
  }
  func.func @transform_3(%arg0: i32) -> (i32, i32) {
    %c0_i32 = arith.constant 0 : i32
    %c0_i32_0 = arith.constant 0 : i32
    %c0_i32_1 = arith.constant 0 : i32
    return %c0_i32, %c0_i32_0 : i32, i32
  }
  func.func @transform_4(%arg0: i32) -> (i32, i32) {
    %c0_i32 = arith.constant 0 : i32
    %c0_i32_0 = arith.constant 0 : i32
    %c0_i32_1 = arith.constant 0 : i32
    return %c0_i32, %c0_i32_0 : i32, i32
  }
  func.func @transform_5(%arg0: i32) -> (i32, i32) {
    %c0_i32 = arith.constant 0 : i32
    %c0_i32_0 = arith.constant 0 : i32
    return %arg0, %c0_i32 : i32, i32
  }
}

</mosaic_0001>

<llo_original>
// kernel: tpu_custom_call.1
$region0: #{tpu_custom_call.1}
  #allocation0 [shape = 'u32[]', space=smem, size = 0x4, offset = 0x4, fixed_abs, tag = 'smem constant byte address 0x4 - core index']
  #allocation1 [shape = 'u32[72,128]{1,0:T(1,128)}', space=vmem, size = 0x9000, scoped, tag = 'internal scratch']
  %s0 = inlined_call_operand.hbm [shape: f32[8,128], index: 0, kind: input, shape index: {}]
  %s1 = inlined_call_operand.hbm [shape: f32[3,128,128], index: 1, kind: input, shape index: {}]
  %s2 = inlined_call_operand.hbm [shape: f32[3,1,128], index: 2, kind: input, shape index: {}]
  %s3 = inlined_call_operand.hbm [shape: f32[128,128], index: 3, kind: input, shape index: {}]
  %s4 = inlined_call_operand.vmem [shape: f32[1,128], index: 4, kind: input, shape index: {}]
  %s5 = inlined_call_operand.hbm [shape: f32[8,128], index: 5, kind: output, shape index: {}]
  %s6 = sld [smem:[#allocation0]]
  $region46: #{tpu_custom_call.1} parent=0
    _
  %s8 = ssub.s32 1, %s6
  %s9 = scalar_select 0, %s8, %s6
  $region1: #{tpu_custom_call.1} parent=0
    #allocation2 [shape = 'u8[4096]{0}', space=vmem, size = 0x1000, scoped, tag = 'input window, operand 0, single buffered']
    #allocation3 [shape = 's32[1]{0}', space=sflag, size = 0x4, scoped, tag = 'scoped memory for tpu_custom_call.1']
    #allocation4 [shape = 's32[1]{0}', space=sflag, size = 0x4, scoped, tag = 'scoped memory for tpu_custom_call.1']
    #allocation5 [shape = 'u8[196608]{0}', space=vmem, size = 0x30000, scoped, tag = 'input window, operand 1, single buffered']
    #allocation6 [shape = 's32[1]{0}', space=sflag, size = 0x4, scoped, tag = 'scoped memory for tpu_custom_call.1']
    #allocation7 [shape = 'u8[1536]{0}', space=vmem, size = 0x800, scoped, tag = 'input window, operand 2, single buffered']
    #allocation8 [shape = 'u8[65536]{0}', space=vmem, size = 0x10000, scoped, tag = 'input window, operand 3, single buffered']
    #allocation9 [shape = 's32[1]{0}', space=sflag, size = 0x4, scoped, tag = 'scoped memory for tpu_custom_call.1']
    #allocation10 [shape = 'u8[4096]{0}', space=vmem, size = 0x1000, scoped, tag = 'output window, operand 0, single buffered']
    %10 = vsyncpa [#allocation3], 0
    %11 = vsyncpa [#allocation6], 0
    %12 = vsyncpa [#allocation9], 0
    %13 = vsyncpa [#allocation4], 0
    // Predicated region
    $region2: #{tpu_custom_call.1} parent=1 // pred_check
      _
    $region3: #{tpu_custom_call.1} parent=1 // pred_check_branch
      %15 = sbr.rel (0) target = $region5
    $region4: #{tpu_custom_call.1} parent=1 // pred_region
      %17 = vsyncadd [#allocation3], 0
      %s19 = sshll.u32 %s0, 4
      %s20 = int_to_ptr.hbm [resolvable:$true] %s19
      %s21 = sshll.u32 [#allocation2], 4
      %s22 = int_to_ptr.vmem [resolvable:$true] %s21
      %24 = dma.hbm_to_vmem [thread:$0]  %s20, 128, %s22, [#allocation3]
    $region5: #{tpu_custom_call.1} parent=1 // pred_fallthru
      _
    // Predicated region
    $region6: #{tpu_custom_call.1} parent=1 // pred_check
      _
    $region7: #{tpu_custom_call.1} parent=1 // pred_check_branch
      %26 = sbr.rel (0) target = $region9
    $region8: #{tpu_custom_call.1} parent=1 // pred_region
      %28 = vsyncadd [#allocation6], 0
      %s29 = sshll.u32 %s1, 4
      %s30 = int_to_ptr.hbm [resolvable:$true] %s29
      %s31 = sshll.u32 [#allocation5], 4
      %s32 = int_to_ptr.vmem [resolvable:$true] %s31
      %37 = dma.hbm_to_vmem [thread:$0]  %s30, 6144, %s32, [#allocation6], 128, 128, 8
    $region9: #{tpu_custom_call.1} parent=1 // pred_fallthru
      _
    // Predicated region
    $region10: #{tpu_custom_call.1} parent=1 // pred_check
      _
    $region11: #{tpu_custom_call.1} parent=1 // pred_check_branch
      %39 = sbr.rel (0) target = $region13
    $region12: #{tpu_custom_call.1} parent=1 // pred_region
      %41 = vsyncadd [#allocation6], 0
      %s42 = sshll.u32 %s2, 4
      %s43 = int_to_ptr.hbm [resolvable:$true] %s42
      %s44 = sshll.u32 [#allocation7], 4
      %s45 = int_to_ptr.vmem [resolvable:$true] %s44
      %50 = dma.hbm_to_vmem [thread:$0]  %s43, 48, %s45, [#allocation6], 16, 16, 1
    $region13: #{tpu_custom_call.1} parent=1 // pred_fallthru
      _
    // Predicated region
    $region14: #{tpu_custom_call.1} parent=1 // pred_check
      _
    $region15: #{tpu_custom_call.1} parent=1 // pred_check_branch
      %52 = sbr.rel (0) target = $region17
    $region16: #{tpu_custom_call.1} parent=1 // pred_region
      %54 = vsyncadd [#allocation9], 0
      %s55 = sshll.u32 %s3, 4
      %s56 = int_to_ptr.hbm [resolvable:$true] %s55
      %s57 = sshll.u32 [#allocation8], 4
      %s58 = int_to_ptr.vmem [resolvable:$true] %s57
      %63 = dma.hbm_to_vmem [thread:$0]  %s56, 2048, %s58, [#allocation9], 128, 128, 8
    $region17: #{tpu_custom_call.1} parent=1 // pred_fallthru
      _
    // Predicated region
    $region18: #{tpu_custom_call.1} parent=1 // pred_check
      _
    $region19: #{tpu_custom_call.1} parent=1 // pred_check_branch
      %65 = sbr.rel (0) target = $region21
    $region20: #{tpu_custom_call.1} parent=1 // pred_region
      _
    $region21: #{tpu_custom_call.1} parent=1 // pred_fallthru
      _
    // Predicated region
    $region22: #{tpu_custom_call.1} parent=1 // pred_check
      _
    $region23: #{tpu_custom_call.1} parent=1 // pred_check_branch
      %67 = sbr.rel (0) target = $region25
    $region24: #{tpu_custom_call.1} parent=1 // pred_region
      %69 = dma.done [#allocation3], 128
    $region25: #{tpu_custom_call.1} parent=1 // pred_fallthru
      _
    // Predicated region
    $region26: #{tpu_custom_call.1} parent=1 // pred_check
      _
    $region27: #{tpu_custom_call.1} parent=1 // pred_check_branch
      %71 = sbr.rel (0) target = $region29
    $region28: #{tpu_custom_call.1} parent=1 // pred_region
      %73 = dma.done [#allocation6], 6144
    $region29: #{tpu_custom_call.1} parent=1 // pred_fallthru
      _
    // Predicated region
    $region30: #{tpu_custom_call.1} parent=1 // pred_check
      _
    $region31: #{tpu_custom_call.1} parent=1 // pred_check_branch
      %75 = sbr.rel (0) target = $region33
    $region32: #{tpu_custom_call.1} parent=1 // pred_region
      %77 = dma.done [#allocation6], 48
    $region33: #{tpu_custom_call.1} parent=1 // pred_fallthru
      _
    // Predicated region
    $region34: #{tpu_custom_call.1} parent=1 // pred_check
      _
    $region35: #{tpu_custom_call.1} parent=1 // pred_check_branch
      %79 = sbr.rel (0) target = $region37
    $region36: #{tpu_custom_call.1} parent=1 // pred_region
      %81 = dma.done [#allocation9], 2048
    $region37: #{tpu_custom_call.1} parent=1 // pred_fallthru
      _
    %v82 = vld [vmem:[#allocation2] sm:$0xff]
    %v83 = vld [vmem:[#allocation5] sm:$0xff]
    %v84 = vld [vmem:[#allocation5 + $0x8] sm:$0xff]
    %v85 = vld [vmem:[#allocation5 + $0x10] sm:$0xff]
    %v86 = vld [vmem:[#allocation5 + $0x18] sm:$0xff]
    %v87 = vld [vmem:[#allocation5 + $0x20] sm:$0xff]
    %v88 = vld [vmem:[#allocation5 + $0x28] sm:$0xff]
    %v89 = vld [vmem:[#allocation5 + $0x30] sm:$0xff]
    %v90 = vld [vmem:[#allocation5 + $0x38] sm:$0xff]
    %v91 = vld [vmem:[#allocation5 + $0x40] sm:$0xff]
    %v92 = vld [vmem:[#allocation5 + $0x48] sm:$0xff]
    %v93 = vld [vmem:[#allocation5 + $0x50] sm:$0xff]
    %v94 = vld [vmem:[#allocation5 + $0x58] sm:$0xff]
    %v95 = vld [vmem:[#allocation5 + $0x60] sm:$0xff]
    %v96 = vld [vmem:[#allocation5 + $0x68] sm:$0xff]
    %v97 = vld [vmem:[#allocation5 + $0x70] sm:$0xff]
    %v98 = vld [vmem:[#allocation5 + $0x78] sm:$0xff]
    %v99 = vld [vmem:[#allocation7] sm:$0x1]
    %v101 = vperm.slane %v99, 0
    %103 = vmatpush.msra.mxu0 %v98
    %104 = vmatpush.msra.mxu0 %v97
    %105 = vmatpush.msra.mxu0 %v96
    %106 = vmatpush.msra.mxu0 %v95
    %107 = vmatpush.msra.mxu0 %v94
    %108 = vmatpush.msra.mxu0 %v93
    %109 = vmatpush.msra.mxu0 %v92
    %110 = vmatpush.msra.mxu0 %v91
    %111 = vmatpush.msra.mxu0 %v90
    %112 = vmatpush.msra.mxu0 %v89
    %113 = vmatpush.msra.mxu0 %v88
    %114 = vmatpush.msra.mxu0 %v87
    %115 = vmatpush.msra.mxu0 %v86
    %116 = vmatpush.msra.mxu0 %v85
    %117 = vmatpush.msra.mxu0 %v84
    %118 = vmatpush.msra.mxu0 %v83
    %119 = vmatmul.f32.gmra.mxu0 %v82
    %v120 = vpop.f32.mrf.mxu0
    %v121 = vadd.f32 %v101, %v120
    %122 = vdwg.mxu0
    %v123 = vmax.f32 %v121, 0.0
    %s124 = scalar_lea.vmem [#allocation5], 128
    %v125 = vld [vmem:[%s124] sm:$0xff]
    %v126 = vld [vmem:[%s124 + $0x8] sm:$0xff]
    %v127 = vld [vmem:[%s124 + $0x10] sm:$0xff]
    %v128 = vld [vmem:[%s124 + $0x18] sm:$0xff]
    %v129 = vld [vmem:[%s124 + $0x20] sm:$0xff]
    %v130 = vld [vmem:[%s124 + $0x28] sm:$0xff]
    %v131 = vld [vmem:[%s124 + $0x30] sm:$0xff]
    %v132 = vld [vmem:[%s124 + $0x38] sm:$0xff]
    %v133 = vld [vmem:[%s124 + $0x40] sm:$0xff]
    %v134 = vld [vmem:[%s124 + $0x48] sm:$0xff]
    %v135 = vld [vmem:[%s124 + $0x50] sm:$0xff]
    %v136 = vld [vmem:[%s124 + $0x58] sm:$0xff]
    %v137 = vld [vmem:[%s124 + $0x60] sm:$0xff]
    %v138 = vld [vmem:[%s124 + $0x68] sm:$0xff]
    %v139 = vld [vmem:[%s124 + $0x70] sm:$0xff]
    %v140 = vld [vmem:[%s124 + $0x78] sm:$0xff]
    %s141 = scalar_lea.vmem [#allocation7], 1
    %v142 = vld [vmem:[%s141] sm:$0x1]
    %v144 = vperm.slane %v142, 0
    %146 = vmatpush.msra.mxu0 %v140
    %147 = vmatpush.msra.mxu0 %v139
    %148 = vmatpush.msra.mxu0 %v138
    %149 = vmatpush.msra.mxu0 %v137
    %150 = vmatpush.msra.mxu0 %v136
    %151 = vmatpush.msra.mxu0 %v135
    %152 = vmatpush.msra.mxu0 %v134
    %153 = vmatpush.msra.mxu0 %v133
    %154 = vmatpush.msra.mxu0 %v132
    %155 = vmatpush.msra.mxu0 %v131
    %156 = vmatpush.msra.mxu0 %v130
    %157 = vmatpush.msra.mxu0 %v129
    %158 = vmatpush.msra.mxu0 %v128
    %159 = vmatpush.msra.mxu0 %v127
    %160 = vmatpush.msra.mxu0 %v126
    %161 = vmatpush.msra.mxu0 %v125
    %162 = vmatmul.f32.gmra.mxu0 %v123
    %v163 = vpop.f32.mrf.mxu0
    %v164 = vadd.f32 %v144, %v163
    %165 = vdwg.mxu0
    %v166 = vmax.f32 %v164, 0.0
    %s167 = scalar_lea.vmem [#allocation5], 256
    %v168 = vld [vmem:[%s167] sm:$0xff]
    %v169 = vld [vmem:[%s167 + $0x8] sm:$0xff]
    %v170 = vld [vmem:[%s167 + $0x10] sm:$0xff]
    %v171 = vld [vmem:[%s167 + $0x18] sm:$0xff]
    %v172 = vld [vmem:[%s167 + $0x20] sm:$0xff]
    %v173 = vld [vmem:[%s167 + $0x28] sm:$0xff]
    %v174 = vld [vmem:[%s167 + $0x30] sm:$0xff]
    %v175 = vld [vmem:[%s167 + $0x38] sm:$0xff]
    %v176 = vld [vmem:[%s167 + $0x40] sm:$0xff]
    %v177 = vld [vmem:[%s167 + $0x48] sm:$0xff]
    %v178 = vld [vmem:[%s167 + $0x50] sm:$0xff]
    %v179 = vld [vmem:[%s167 + $0x58] sm:$0xff]
    %v180 = vld [vmem:[%s167 + $0x60] sm:$0xff]
    %v181 = vld [vmem:[%s167 + $0x68] sm:$0xff]
    %v182 = vld [vmem:[%s167 + $0x70] sm:$0xff]
    %v183 = vld [vmem:[%s167 + $0x78] sm:$0xff]
    %s184 = scalar_lea.vmem [#allocation7], 2
    %v185 = vld [vmem:[%s184] sm:$0x1]
    %v187 = vperm.slane %v185, 0
    %189 = vmatpush.msra.mxu0 %v183
    %190 = vmatpush.msra.mxu0 %v182
    %191 = vmatpush.msra.mxu0 %v181
    %192 = vmatpush.msra.mxu0 %v180
    %193 = vmatpush.msra.mxu0 %v179
    %194 = vmatpush.msra.mxu0 %v178
    %195 = vmatpush.msra.mxu0 %v177
    %196 = vmatpush.msra.mxu0 %v176
    %197 = vmatpush.msra.mxu0 %v175
    %198 = vmatpush.msra.mxu0 %v174
    %199 = vmatpush.msra.mxu0 %v173
    %200 = vmatpush.msra.mxu0 %v172
    %201 = vmatpush.msra.mxu0 %v171
    %202 = vmatpush.msra.mxu0 %v170
    %203 = vmatpush.msra.mxu0 %v169
    %204 = vmatpush.msra.mxu0 %v168
    %205 = vmatmul.f32.gmra.mxu0 %v166
    %v206 = vpop.f32.mrf.mxu0
    %v207 = vadd.f32 %v187, %v206
    %208 = vdwg.mxu0
    %v209 = vmax.f32 %v207, 0.0
    %v210 = vld [vmem:[#allocation8] sm:$0xff]
    %v211 = vld [vmem:[#allocation8 + $0x8] sm:$0xff]
    %v212 = vld [vmem:[#allocation8 + $0x10] sm:$0xff]
    %v213 = vld [vmem:[#allocation8 + $0x18] sm:$0xff]
    %v214 = vld [vmem:[#allocation8 + $0x20] sm:$0xff]
    %v215 = vld [vmem:[#allocation8 + $0x28] sm:$0xff]
    %v216 = vld [vmem:[#allocation8 + $0x30] sm:$0xff]
    %v217 = vld [vmem:[#allocation8 + $0x38] sm:$0xff]
    %v218 = vld [vmem:[#allocation8 + $0x40] sm:$0xff]
    %v219 = vld [vmem:[#allocation8 + $0x48] sm:$0xff]
    %v220 = vld [vmem:[#allocation8 + $0x50] sm:$0xff]
    %v221 = vld [vmem:[#allocation8 + $0x58] sm:$0xff]
    %v222 = vld [vmem:[#allocation8 + $0x60] sm:$0xff]
    %v223 = vld [vmem:[#allocation8 + $0x68] sm:$0xff]
    %v224 = vld [vmem:[#allocation8 + $0x70] sm:$0xff]
    %v225 = vld [vmem:[#allocation8 + $0x78] sm:$0xff]
    %v226 = vld [vmem:[%s4] sm:$0x1]
    %v228 = vperm.slane %v226, 0
    %230 = vmatpush.msra.mxu0 %v225
    %231 = vmatpush.msra.mxu0 %v224
    %232 = vmatpush.msra.mxu0 %v223
    %233 = vmatpush.msra.mxu0 %v222
    %234 = vmatpush.msra.mxu0 %v221
    %235 = vmatpush.msra.mxu0 %v220
    %236 = vmatpush.msra.mxu0 %v219
    %237 = vmatpush.msra.mxu0 %v218
    %238 = vmatpush.msra.mxu0 %v217
    %239 = vmatpush.msra.mxu0 %v216
    %240 = vmatpush.msra.mxu0 %v215
    %241 = vmatpush.msra.mxu0 %v214
    %242 = vmatpush.msra.mxu0 %v213
    %243 = vmatpush.msra.mxu0 %v212
    %244 = vmatpush.msra.mxu0 %v211
    %245 = vmatpush.msra.mxu0 %v210
    %246 = vmatmul.f32.gmra.mxu0 %v209
    %v247 = vpop.f32.mrf.mxu0
    %v248 = vadd.f32 %v228, %v247
    %249 = vdwg.mxu0
    %v250 = vmax.f32 %v248, 0.0
    %251 = vst [vmem:[#allocation10] sm:$0xff] %v250
    // Predicated region
    $region38: #{tpu_custom_call.1} parent=1 // pred_check
      _
    $region39: #{tpu_custom_call.1} parent=1 // pred_check_branch
      %253 = sbr.rel (0) target = $region41
    $region40: #{tpu_custom_call.1} parent=1 // pred_region
      %255 = vsyncadd [#allocation4], 0
      %s257 = sshll.u32 [#allocation10], 4
      %s258 = int_to_ptr.vmem [resolvable:$true] %s257
      %s259 = sshll.u32 %s5, 4
      %s260 = int_to_ptr.hbm [resolvable:$true] %s259
      %262 = dma.vmem_to_hbm [thread:$0]  %s258, 128, %s260, [#allocation4]
    $region41: #{tpu_custom_call.1} parent=1 // pred_fallthru
      _
    // Predicated region
    $region42: #{tpu_custom_call.1} parent=1 // pred_check
      _
    $region43: #{tpu_custom_call.1} parent=1 // pred_check_branch
      %264 = sbr.rel (0) target = $region45
    $region44: #{tpu_custom_call.1} parent=1 // pred_region
      %266 = dma.done [#allocation4], 128
    $region45: #{tpu_custom_call.1} parent=1 // pred_fallthru
      _
    %267 = vsyncpa [#allocation3], 1
    %268 = vsyncpa [#allocation6], 1
    %269 = vsyncpa [#allocation9], 1
    %270 = vsyncpa [#allocation4], 1

// kernel: tpu_custom_call.1
$region0: #{tpu_custom_call.1}
  #allocation0 [shape = 'u32[]', space=smem, size = 0x4, offset = 0x4, fixed_abs, tag = 'smem constant byte address 0x4 - core index']
  #allocation1 [shape = 'u32[72,128]{1,0:T(1,128)}', space=vmem, size = 0x9000, scoped, tag = 'internal scratch']
  %s0 = inlined_call_operand.hbm [shape: f32[8,128], index: 0, kind: input, shape index: {}]
  %s1 = inlined_call_operand.hbm [shape: f32[3,128,128], index: 1, kind: input, shape index: {}]
  %s2 = inlined_call_operand.hbm [shape: f32[3,1,128], index: 2, kind: input, shape index: {}]
  %s3 = inlined_call_operand.hbm [shape: f32[128,128], index: 3, kind: input, shape index: {}]
  %s4 = inlined_call_operand.vmem [shape: f32[1,128], index: 4, kind: input, shape index: {}]
  %s5 = inlined_call_operand.hbm [shape: f32[8,128], index: 5, kind: output, shape index: {}]
  %s6 = sld [smem:[#allocation0]]
  $region46: #{tpu_custom_call.1} parent=0
    _
  %s8 = ssub.s32 1, %s6
  %s9 = scalar_select 0, %s8, %s6
  $region1: #{tpu_custom_call.1} parent=0
    #allocation2 [shape = 'u8[4096]{0}', space=vmem, size = 0x1000, scoped, tag = 'input window, operand 0, single buffered']
    #allocation3 [shape = 's32[1]{0}', space=sflag, size = 0x4, scoped, tag = 'scoped memory for tpu_custom_call.1']
    #allocation4 [shape = 's32[1]{0}', space=sflag, size = 0x4, scoped, tag = 'scoped memory for tpu_custom_call.1']
    #allocation5 [shape = 'u8[196608]{0}', space=vmem, size = 0x30000, scoped, tag = 'input window, operand 1, single buffered']
    #allocation6 [shape = 's32[1]{0}', space=sflag, size = 0x4, scoped, tag = 'scoped memory for tpu_custom_call.1']
    #allocation7 [shape = 'u8[1536]{0}', space=vmem, size = 0x800, scoped, tag = 'input window, operand 2, single buffered']
    #allocation8 [shape = 'u8[65536]{0}', space=vmem, size = 0x10000, scoped, tag = 'input window, operand 3, single buffered']
    #allocation9 [shape = 's32[1]{0}', space=sflag, size = 0x4, scoped, tag = 'scoped memory for tpu_custom_call.1']
    #allocation10 [shape = 'u8[4096]{0}', space=vmem, size = 0x1000, scoped, tag = 'output window, operand 0, single buffered']
    %10 = vsyncpa [#allocation3], 0
    %11 = vsyncpa [#allocation6], 0
    %12 = vsyncpa [#allocation9], 0
    %13 = vsyncpa [#allocation4], 0
    // Predicated region
    $region2: #{tpu_custom_call.1} parent=1 // pred_check
      _
    $region3: #{tpu_custom_call.1} parent=1 // pred_check_branch
      %15 = sbr.rel (0) target = $region5
    $region4: #{tpu_custom_call.1} parent=1 // pred_region
      %17 = vsyncadd [#allocation3], 0
      %s19 = sshll.u32 %s0, 4
      %s20 = int_to_ptr.hbm [resolvable:$true] %s19
      %s21 = sshll.u32 [#allocation2], 4
      %s22 = int_to_ptr.vmem [resolvable:$true] %s21
      %24 = dma.hbm_to_vmem [thread:$0]  %s20, 128, %s22, [#allocation3]
    $region5: #{tpu_custom_call.1} parent=1 // pred_fallthru
      _
    // Predicated region
    $region6: #{tpu_custom_call.1} parent=1 // pred_check
      _
    $region7: #{tpu_custom_call.1} parent=1 // pred_check_branch
      %26 = sbr.rel (0) target = $region9
    $region8: #{tpu_custom_call.1} parent=1 // pred_region
      %28 = vsyncadd [#allocation6], 0
      %s29 = sshll.u32 %s1, 4
      %s30 = int_to_ptr.hbm [resolvable:$true] %s29
      %s31 = sshll.u32 [#allocation5], 4
      %s32 = int_to_ptr.vmem [resolvable:$true] %s31
      %37 = dma.hbm_to_vmem [thread:$0]  %s30, 6144, %s32, [#allocation6], 128, 128, 8
    $region9: #{tpu_custom_call.1} parent=1 // pred_fallthru
      _
    // Predicated region
    $region10: #{tpu_custom_call.1} parent=1 // pred_check
      _
    $region11: #{tpu_custom_call.1} parent=1 // pred_check_branch
      %39 = sbr.rel (0) target = $region13
    $region12: #{tpu_custom_call.1} parent=1 // pred_region
      %41 = vsyncadd [#allocation6], 0
      %s42 = sshll.u32 %s2, 4
      %s43 = int_to_ptr.hbm [resolvable:$true] %s42
      %s44 = sshll.u32 [#allocation7], 4
      %s45 = int_to_ptr.vmem [resolvable:$true] %s44
      %50 = dma.hbm_to_vmem [thread:$0]  %s43, 48, %s45, [#allocation6], 16, 16, 1
    $region13: #{tpu_custom_call.1} parent=1 // pred_fallthru
      _
    // Predicated region
    $region14: #{tpu_custom_call.1} parent=1 // pred_check
      _
    $region15: #{tpu_custom_call.1} parent=1 // pred_check_branch
      %52 = sbr.rel (0) target = $region17
    $region16: #{tpu_custom_call.1} parent=1 // pred_region
      %54 = vsyncadd [#allocation9], 0
      %s55 = sshll.u32 %s3, 4
      %s56 = int_to_ptr.hbm [resolvable:$true] %s55
      %s57 = sshll.u32 [#allocation8], 4
      %s58 = int_to_ptr.vmem [resolvable:$true] %s57
      %63 = dma.hbm_to_vmem [thread:$0]  %s56, 2048, %s58, [#allocation9], 128, 128, 8
    $region17: #{tpu_custom_call.1} parent=1 // pred_fallthru
      _
    // Predicated region
    $region18: #{tpu_custom_call.1} parent=1 // pred_check
      _
    $region19: #{tpu_custom_call.1} parent=1 // pred_check_branch
      %65 = sbr.rel (0) target = $region21
    $region20: #{tpu_custom_call.1} parent=1 // pred_region
      _
    $region21: #{tpu_custom_call.1} parent=1 // pred_fallthru
      _
    // Predicated region
    $region22: #{tpu_custom_call.1} parent=1 // pred_check
      _
    $region23: #{tpu_custom_call.1} parent=1 // pred_check_branch
      %67 = sbr.rel (0) target = $region25
    $region24: #{tpu_custom_call.1} parent=1 // pred_region
      %69 = dma.done [#allocation3], 128
    $region25: #{tpu_custom_call.1} parent=1 // pred_fallthru
      _
    // Predicated region
    $region26: #{tpu_custom_call.1} parent=1 // pred_check
      _
    $region27: #{tpu_custom_call.1} parent=1 // pred_check_branch
      %71 = sbr.rel (0) target = $region29
    $region28: #{tpu_custom_call.1} parent=1 // pred_region
      %73 = dma.done [#allocation6], 6144
    $region29: #{tpu_custom_call.1} parent=1 // pred_fallthru
      _
    // Predicated region
    $region30: #{tpu_custom_call.1} parent=1 // pred_check
      _
    $region31: #{tpu_custom_call.1} parent=1 // pred_check_branch
      %75 = sbr.rel (0) target = $region33
    $region32: #{tpu_custom_call.1} parent=1 // pred_region
      %77 = dma.done [#allocation6], 48
    $region33: #{tpu_custom_call.1} parent=1 // pred_fallthru
      _
    // Predicated region
    $region34: #{tpu_custom_call.1} parent=1 // pred_check
      _
    $region35: #{tpu_custom_call.1} parent=1 // pred_check_branch
      %79 = sbr.rel (0) target = $region37
    $region36: #{tpu_custom_call.1} parent=1 // pred_region
      %81 = dma.done [#allocation9], 2048
    $region37: #{tpu_custom_call.1} parent=1 // pred_fallthru
      _
    %v82 = vld [vmem:[#allocation2] sm:$0xff]
    %v83 = vld [vmem:[#allocation5] sm:$0xff]
    %v84 = vld [vmem:[#allocation5 + $0x8] sm:$0xff]
    %v85 = vld [vmem:[#allocation5 + $0x10] sm:$0xff]
    %v86 = vld [vmem:[#allocation5 + $0x18] sm:$0xff]
    %v87 = vld [vmem:[#allocation5 + $0x20] sm:$0xff]
    %v88 = vld [vmem:[#allocation5 + $0x28] sm:$0xff]
    %v89 = vld [vmem:[#allocation5 + $0x30] sm:$0xff]
    %v90 = vld [vmem:[#allocation5 + $0x38] sm:$0xff]
    %v91 = vld [vmem:[#allocation5 + $0x40] sm:$0xff]
    %v92 = vld [vmem:[#allocation5 + $0x48] sm:$0xff]
    %v93 = vld [vmem:[#allocation5 + $0x50] sm:$0xff]
    %v94 = vld [vmem:[#allocation5 + $0x58] sm:$0xff]
    %v95 = vld [vmem:[#allocation5 + $0x60] sm:$0xff]
    %v96 = vld [vmem:[#allocation5 + $0x68] sm:$0xff]
    %v97 = vld [vmem:[#allocation5 + $0x70] sm:$0xff]
    %v98 = vld [vmem:[#allocation5 + $0x78] sm:$0xff]
    %v99 = vld [vmem:[#allocation7] sm:$0x1]
    %v101 = vperm.slane %v99, 0
    %103 = vmatpush.msra.mxu0 %v98
    %104 = vmatpush.msra.mxu0 %v97
    %105 = vmatpush.msra.mxu0 %v96
    %106 = vmatpush.msra.mxu0 %v95
    %107 = vmatpush.msra.mxu0 %v94
    %108 = vmatpush.msra.mxu0 %v93
    %109 = vmatpush.msra.mxu0 %v92
    %110 = vmatpush.msra.mxu0 %v91
    %111 = vmatpush.msra.mxu0 %v90
    %112 = vmatpush.msra.mxu0 %v89
    %113 = vmatpush.msra.mxu0 %v88
    %114 = vmatpush.msra.mxu0 %v87
    %115 = vmatpush.msra.mxu0 %v86
    %116 = vmatpush.msra.mxu0 %v85
    %117 = vmatpush.msra.mxu0 %v84
    %118 = vmatpush.msra.mxu0 %v83
    %119 = vmatmul.f32.gmra.mxu0 %v82
    %v120 = vpop.f32.mrf.mxu0
    %v121 = vadd.f32 %v101, %v120
    %122 = vdwg.mxu0
    %v123 = vmax.f32 %v121, 0.0
    %s124 = scalar_lea.vmem [#allocation5], 128
    %v125 = vld [vmem:[%s124] sm:$0xff]
    %v126 = vld [vmem:[%s124 + $0x8] sm:$0xff]
    %v127 = vld [vmem:[%s124 + $0x10] sm:$0xff]
    %v128 = vld [vmem:[%s124 + $0x18] sm:$0xff]
    %v129 = vld [vmem:[%s124 + $0x20] sm:$0xff]
    %v130 = vld [vmem:[%s124 + $0x28] sm:$0xff]
    %v131 = vld [vmem:[%s124 + $0x30] sm:$0xff]
    %v132 = vld [vmem:[%s124 + $0x38] sm:$0xff]
    %v133 = vld [vmem:[%s124 + $0x40] sm:$0xff]
    %v134 = vld [vmem:[%s124 + $0x48] sm:$0xff]
    %v135 = vld [vmem:[%s124 + $0x50] sm:$0xff]
    %v136 = vld [vmem:[%s124 + $0x58] sm:$0xff]
    %v137 = vld [vmem:[%s124 + $0x60] sm:$0xff]
    %v138 = vld [vmem:[%s124 + $0x68] sm:$0xff]
    %v139 = vld [vmem:[%s124 + $0x70] sm:$0xff]
    %v140 = vld [vmem:[%s124 + $0x78] sm:$0xff]
    %s141 = scalar_lea.vmem [#allocation7], 1
    %v142 = vld [vmem:[%s141] sm:$0x1]
    %v144 = vperm.slane %v142, 0
    %146 = vmatpush.msra.mxu0 %v140
    %147 = vmatpush.msra.mxu0 %v139
    %148 = vmatpush.msra.mxu0 %v138
    %149 = vmatpush.msra.mxu0 %v137
    %150 = vmatpush.msra.mxu0 %v136
    %151 = vmatpush.msra.mxu0 %v135
    %152 = vmatpush.msra.mxu0 %v134
    %153 = vmatpush.msra.mxu0 %v133
    %154 = vmatpush.msra.mxu0 %v132
    %155 = vmatpush.msra.mxu0 %v131
    %156 = vmatpush.msra.mxu0 %v130
    %157 = vmatpush.msra.mxu0 %v129
    %158 = vmatpush.msra.mxu0 %v128
    %159 = vmatpush.msra.mxu0 %v127
    %160 = vmatpush.msra.mxu0 %v126
    %161 = vmatpush.msra.mxu0 %v125
    %162 = vmatmul.f32.gmra.mxu0 %v123
    %v163 = vpop.f32.mrf.mxu0
    %v164 = vadd.f32 %v144, %v163
    %165 = vdwg.mxu0
    %v166 = vmax.f32 %v164, 0.0
    %s167 = scalar_lea.vmem [#allocation5], 256
    %v168 = vld [vmem:[%s167] sm:$0xff]
    %v169 = vld [vmem:[%s167 + $0x8] sm:$0xff]
    %v170 = vld [vmem:[%s167 + $0x10] sm:$0xff]
    %v171 = vld [vmem:[%s167 + $0x18] sm:$0xff]
    %v172 = vld [vmem:[%s167 + $0x20] sm:$0xff]
    %v173 = vld [vmem:[%s167 + $0x28] sm:$0xff]
    %v174 = vld [vmem:[%s167 + $0x30] sm:$0xff]
    %v175 = vld [vmem:[%s167 + $0x38] sm:$0xff]
    %v176 = vld [vmem:[%s167 + $0x40] sm:$0xff]
    %v177 = vld [vmem:[%s167 + $0x48] sm:$0xff]
    %v178 = vld [vmem:[%s167 + $0x50] sm:$0xff]
    %v179 = vld [vmem:[%s167 + $0x58] sm:$0xff]
    %v180 = vld [vmem:[%s167 + $0x60] sm:$0xff]
    %v181 = vld [vmem:[%s167 + $0x68] sm:$0xff]
    %v182 = vld [vmem:[%s167 + $0x70] sm:$0xff]
    %v183 = vld [vmem:[%s167 + $0x78] sm:$0xff]
    %s184 = scalar_lea.vmem [#allocation7], 2
    %v185 = vld [vmem:[%s184] sm:$0x1]
    %v187 = vperm.slane %v185, 0
    %189 = vmatpush.msra.mxu0 %v183
    %190 = vmatpush.msra.mxu0 %v182
    %191 = vmatpush.msra.mxu0 %v181
    %192 = vmatpush.msra.mxu0 %v180
    %193 = vmatpush.msra.mxu0 %v179
    %194 = vmatpush.msra.mxu0 %v178
    %195 = vmatpush.msra.mxu0 %v177
    %196 = vmatpush.msra.mxu0 %v176
    %197 = vmatpush.msra.mxu0 %v175
    %198 = vmatpush.msra.mxu0 %v174
    %199 = vmatpush.msra.mxu0 %v173
    %200 = vmatpush.msra.mxu0 %v172
    %201 = vmatpush.msra.mxu0 %v171
    %202 = vmatpush.msra.mxu0 %v170
    %203 = vmatpush.msra.mxu0 %v169
    %204 = vmatpush.msra.mxu0 %v168
    %205 = vmatmul.f32.gmra.mxu0 %v166
    %v206 = vpop.f32.mrf.mxu0
    %v207 = vadd.f32 %v187, %v206
    %208 = vdwg.mxu0
    %v209 = vmax.f32 %v207, 0.0
    %v210 = vld [vmem:[#allocation8] sm:$0xff]
    %v211 = vld [vmem:[#allocation8 + $0x8] sm:$0xff]
    %v212 = vld [vmem:[#allocation8 + $0x10] sm:$0xff]
    %v213 = vld [vmem:[#allocation8 + $0x18] sm:$0xff]
    %v214 = vld [vmem:[#allocation8 + $0x20] sm:$0xff]
    %v215 = vld [vmem:[#allocation8 + $0x28] sm:$0xff]
    %v216 = vld [vmem:[#allocation8 + $0x30] sm:$0xff]
    %v217 = vld [vmem:[#allocation8 + $0x38] sm:$0xff]
    %v218 = vld [vmem:[#allocation8 + $0x40] sm:$0xff]
    %v219 = vld [vmem:[#allocation8 + $0x48] sm:$0xff]
    %v220 = vld [vmem:[#allocation8 + $0x50] sm:$0xff]
    %v221 = vld [vmem:[#allocation8 + $0x58] sm:$0xff]
    %v222 = vld [vmem:[#allocation8 + $0x60] sm:$0xff]
    %v223 = vld [vmem:[#allocation8 + $0x68] sm:$0xff]
    %v224 = vld [vmem:[#allocation8 + $0x70] sm:$0xff]
    %v225 = vld [vmem:[#allocation8 + $0x78] sm:$0xff]
    %v226 = vld [vmem:[%s4] sm:$0x1]
    %v228 = vperm.slane %v226, 0
    %230 = vmatpush.msra.mxu0 %v225
    %231 = vmatpush.msra.mxu0 %v224
    %232 = vmatpush.msra.mxu0 %v223
    %233 = vmatpush.msra.mxu0 %v222
    %234 = vmatpush.msra.mxu0 %v221
    %235 = vmatpush.msra.mxu0 %v220
    %236 = vmatpush.msra.mxu0 %v219
    %237 = vmatpush.msra.mxu0 %v218
    %238 = vmatpush.msra.mxu0 %v217
    %239 = vmatpush.msra.mxu0 %v216
    %240 = vmatpush.msra.mxu0 %v215
    %241 = vmatpush.msra.mxu0 %v214
    %242 = vmatpush.msra.mxu0 %v213
    %243 = vmatpush.msra.mxu0 %v212
    %244 = vmatpush.msra.mxu0 %v211
    %245 = vmatpush.msra.mxu0 %v210
    %246 = vmatmul.f32.gmra.mxu0 %v209
    %v247 = vpop.f32.mrf.mxu0
    %v248 = vadd.f32 %v228, %v247
    %249 = vdwg.mxu0
    %v250 = vmax.f32 %v248, 0.0
    %251 = vst [vmem:[#allocation10] sm:$0xff] %v250
    // Predicated region
    $region38: #{tpu_custom_call.1} parent=1 // pred_check
      _
    $region39: #{tpu_custom_call.1} parent=1 // pred_check_branch
      %253 = sbr.rel (0) target = $region41
    $region40: #{tpu_custom_call.1} parent=1 // pred_region
      %255 = vsyncadd [#allocation4], 0
      %s257 = sshll.u32 [#allocation10], 4
      %s258 = int_to_ptr.vmem [resolvable:$true] %s257
      %s259 = sshll.u32 %s5, 4
      %s260 = int_to_ptr.hbm [resolvable:$true] %s259
      %262 = dma.vmem_to_hbm [thread:$0]  %s258, 128, %s260, [#allocation4]
    $region41: #{tpu_custom_call.1} parent=1 // pred_fallthru
      _
    // Predicated region
    $region42: #{tpu_custom_call.1} parent=1 // pred_check
      _
    $region43: #{tpu_custom_call.1} parent=1 // pred_check_branch
      %264 = sbr.rel (0) target = $region45
    $region44: #{tpu_custom_call.1} parent=1 // pred_region
      %266 = dma.done [#allocation4], 128
    $region45: #{tpu_custom_call.1} parent=1 // pred_fallthru
      _
    %267 = vsyncpa [#allocation3], 1
    %268 = vsyncpa [#allocation6], 1
    %269 = vsyncpa [#allocation9], 1
    %270 = vsyncpa [#allocation4], 1

</llo_original>
